<compile_context>
chip_gen: v7x
topology: tpu7x:2x2x1
jax: 0.10.0
libtpu: 0.0.40
codegen_flags: <defaults>
</compile_context>

<pallas_src>
import jax
import jax.numpy as jnp
from jax.experimental import pallas as pl
from jax.experimental.pallas import tpu as pltpu

SUBLANE = 8  # batch rows padded to a multiple of the sublane count


def _round_up(n, m):
    return ((n + m - 1) // m) * m


def _pad_rows(x, rows):
    if rows == x.shape[0]:
        return x
    return jnp.pad(x, ((0, rows - x.shape[0]), (0, 0)))


def _mlp_kernel(x_ref, w1_ref, b1_ref, w2_ref, b2_ref, o_ref):
    """Fused Linear -> ReLU -> Linear on one batch tile.

    x_ref  : [TB, IN]   f32   (cast to bf16 in-kernel; avoids an HBM prep pass)
    w1_ref : [IN, HID]  bf16  (pre-transposed MXU-native layout)
    b1_ref : [1, HID]   f32
    w2_ref : [HID, OUT] bf16
    b2_ref : [1, OUT]   f32
    o_ref  : [TB, OUT]  f32
    """
    x = x_ref[...].astype(jnp.bfloat16)
    # Layer 1: (M,K)x(K,N) — MXU-native, no transpose; f32 accumulation.
    h = jnp.dot(x, w1_ref[...], preferred_element_type=jnp.float32)
    h = jnp.maximum(h + b1_ref[...], 0.0)            # bias + ReLU in f32 (VPU)
    # Layer 2.
    y = jnp.dot(h.astype(jnp.bfloat16), w2_ref[...],
                preferred_element_type=jnp.float32)
    o_ref[...] = y + b2_ref[...]


def prepare_simplenet_params(w1, b1, w2, b2):
    """One-time parameter prep (do NOT call per forward pass).

    PyTorch Linear stores weights as [out, in]; pre-transpose once to the
    MXU-native [in, out] layout, cast to bf16, and reshape biases to 2-D.
    """
    w1t = jnp.asarray(w1, jnp.float32).T.astype(jnp.bfloat16)   # [in,  hid]
    w2t = jnp.asarray(w2, jnp.float32).T.astype(jnp.bfloat16)   # [hid, out]
    b1r = jnp.asarray(b1, jnp.float32).reshape(1, -1)           # [1, hid]
    b2r = jnp.asarray(b2, jnp.float32).reshape(1, -1)           # [1, out]
    return w1t, b1r, w2t, b2r


def simplenet_forward(x, w1t, b1, w2t, b2, *, gridless_max=512, target_tile=1024):
    """y = relu(x @ W1 + b1) @ W2 + b2 with pre-transposed params."""
    B, in_features = x.shape
    assert w1t.shape[0] == in_features
    hidden = w1t.shape[1]
    out_features = w2t.shape[1]

    x = x.astype(jnp.float32)
    b8 = _round_up(B, SUBLANE)

    if b8 <= gridless_max:
        # Small batch: single gridless invocation, everything resident in VMEM.
        # (At B <= ~64 plain XLA would do as well; kept as Pallas by design.)
        xp = _pad_rows(x, b8)
        vmem = pl.BlockSpec(memory_space=pltpu.MemorySpace.VMEM)
        out = pl.pallas_call(
            _mlp_kernel,
            out_shape=jax.ShapeDtypeStruct((b8, out_features), jnp.float32),
            in_specs=[vmem] * 5,
            out_specs=vmem,
        )(xp, w1t, b1, w2t, b2)
        return out[:B]

    # Large batch: tile only over B; weights/biases stay resident across the
    # grid. Tile sized toward 512-1024 rows, grid kept even so v7x's two
    # TensorCores both get work; batch-padding waste stays minimal.
    n_steps = max(2, pl.cdiv(b8, target_tile))
    if n_steps % 2:
        n_steps += 1
    batch_tile = _round_up(pl.cdiv(b8, n_steps), SUBLANE)
    b_pad = batch_tile * n_steps
    xp = _pad_rows(x, b_pad)

    flops = 2 * b_pad * (in_features * hidden + hidden * out_features)
    bytes_accessed = (b_pad * in_features * 4            # x (f32)
                      + in_features * hidden * 2          # w1 (bf16)
                      + hidden * out_features * 2         # w2 (bf16)
                      + (hidden + out_features) * 4       # biases (f32)
                      + b_pad * out_features * 4)         # y (f32)

    out = pl.pallas_call(
        _mlp_kernel,
        out_shape=jax.ShapeDtypeStruct((b_pad, out_features), jnp.float32),
        grid=(n_steps,),
        in_specs=[
            pl.BlockSpec((batch_tile, in_features), lambda i: (i, 0)),
            pl.BlockSpec((in_features, hidden), lambda i: (0, 0)),   # resident
            pl.BlockSpec((1, hidden), lambda i: (0, 0)),
            pl.BlockSpec((hidden, out_features), lambda i: (0, 0)),
            pl.BlockSpec((1, out_features), lambda i: (0, 0)),
        ],
        out_specs=pl.BlockSpec((batch_tile, out_features), lambda i: (i, 0)),
        compiler_params=pltpu.CompilerParams(
            dimension_semantics=("parallel",)),  # shard batch over TCs (v7x)
        cost_estimate=pl.CostEstimate(
            flops=flops, transcendentals=0, bytes_accessed=bytes_accessed),
    )(xp, w1t, b1, w2t, b2)
    return out[:B]


def init_linear_params(key, in_features, out_features):
    # Deterministic init mimicking torch.nn.Linear (uniform +/- 1/sqrt(fan_in)).
    kw, kb = jax.random.split(key)
    bound = 1.0 / (in_features ** 0.5)
    w = jax.random.uniform(kw, (out_features, in_features),
                           minval=-bound, maxval=bound, dtype=jnp.float32)
    b = jax.random.uniform(kb, (out_features,),
                           minval=-bound, maxval=bound, dtype=jnp.float32)
    return w, b


if __name__ == "__main__":
    input_size, hidden_size, output_size = 32, 64, 16

    key = jax.random.PRNGKey(0)
    kx1, kx2, k1, k2 = jax.random.split(key, 4)

    w1, b1 = init_linear_params(k1, input_size, hidden_size)
    w2, b2 = init_linear_params(k2, hidden_size, output_size)

    # One-time parameter prep (transpose / bf16 cast hoisted out of forward).
    w1t, b1r, w2t, b2r = prepare_simplenet_params(w1, b1, w2, b2)
    w1t, b1r, w2t, b2r = jax.block_until_ready((w1t, b1r, w2t, b2r))

    def reference(x):
        # Pure-JAX reference with the same bf16-matmul / f32-accumulate recipe.
        # (Not bit-identical to a pure-f32 PyTorch SimpleNet; tolerance-checked.)
        h = jnp.maximum(
            jnp.dot(x.astype(jnp.bfloat16), w1.astype(jnp.bfloat16).T,
                    preferred_element_type=jnp.float32) + b1[None, :], 0.0)
        return jnp.dot(h.astype(jnp.bfloat16), w2.astype(jnp.bfloat16).T,
                       preferred_element_type=jnp.float32) + b2[None, :]

    # Small batch -> gridless VMEM-resident path.
    x_small = jax.random.normal(kx1, (8, input_size), dtype=jnp.float32)
    out_small = jax.block_until_ready(
        simplenet_forward(x_small, w1t, b1r, w2t, b2r))
    assert out_small.shape == (8, output_size)
    assert jnp.allclose(out_small, reference(x_small), atol=5e-3, rtol=5e-3)

    # Larger batch -> batch-tiled path (even grid of ~B/2-row tiles,
    # weights resident, unpadded feature dims).
    x_big = jax.random.normal(kx2, (600, input_size), dtype=jnp.float32)
    out_big = jax.block_until_ready(
        simplenet_forward(x_big, w1t, b1r, w2t, b2r))
    assert out_big.shape == (600, output_size)
    assert jnp.allclose(out_big, reference(x_big), atol=5e-3, rtol=5e-3)

    print("KERNEL_OK")
</pallas_src>

<mosaic_0001>
module attributes {stable_mosaic.version = 11 : i64} {
  func.func @_mlp_kernel(%arg0: memref<8x32xf32, #tpu.memory_space<vmem>>, %arg1: memref<32x64xbf16, #tpu.memory_space<vmem>>, %arg2: memref<1x64xf32, #tpu.memory_space<vmem>>, %arg3: memref<64x16xbf16, #tpu.memory_space<vmem>>, %arg4: memref<1x16xf32, #tpu.memory_space<vmem>>, %arg5: memref<8x16xf32, #tpu.memory_space<vmem>>) attributes {dimension_semantics = [], scalar_prefetch = 0 : i64, scratch_operands = 0 : i64, tpu.core_type = #tpu.core_type<tc>} {
    %c0 = arith.constant 0 : index
    %c0_0 = arith.constant 0 : index
    %0 = vector.load %arg0[%c0, %c0_0] : memref<8x32xf32, #tpu.memory_space<vmem>>, vector<8x32xf32>
    %1 = arith.truncf %0 : vector<8x32xf32> to vector<8x32xbf16>
    %c0_1 = arith.constant 0 : index
    %c0_2 = arith.constant 0 : index
    %2 = vector.load %arg1[%c0_1, %c0_2] : memref<32x64xbf16, #tpu.memory_space<vmem>>, vector<32x64xbf16>
    %cst = arith.constant dense<0.000000e+00> : vector<8x64xf32>
    %3 = tpu.matmul %1, %2, %cst {dimension_numbers = #tpu.dot_dimension_numbers<[1], [0], [0], [1], [0, 0, 1, 1], [], []>} : vector<8x32xbf16>, vector<32x64xbf16>, vector<8x64xf32> -> vector<8x64xf32>
    %c0_3 = arith.constant 0 : index
    %c0_4 = arith.constant 0 : index
    %4 = vector.load %arg2[%c0_3, %c0_4] : memref<1x64xf32, #tpu.memory_space<vmem>>, vector<1x64xf32>
    %5 = vector.broadcast %4 : vector<1x64xf32> to vector<8x64xf32>
    %6 = arith.addf %3, %5 : vector<8x64xf32>
    %cst_5 = arith.constant 0.000000e+00 : f32
    %7 = vector.broadcast %cst_5 : f32 to vector<8x64xf32>
    %8 = arith.maximumf %6, %7 : vector<8x64xf32>
    %9 = arith.truncf %8 : vector<8x64xf32> to vector<8x64xbf16>
    %c0_6 = arith.constant 0 : index
    %c0_7 = arith.constant 0 : index
    %10 = vector.load %arg3[%c0_6, %c0_7] : memref<64x16xbf16, #tpu.memory_space<vmem>>, vector<64x16xbf16>
    %cst_8 = arith.constant dense<0.000000e+00> : vector<8x16xf32>
    %11 = tpu.matmul %9, %10, %cst_8 {dimension_numbers = #tpu.dot_dimension_numbers<[1], [0], [0], [1], [0, 0, 1, 1], [], []>} : vector<8x64xbf16>, vector<64x16xbf16>, vector<8x16xf32> -> vector<8x16xf32>
    %c0_9 = arith.constant 0 : index
    %c0_10 = arith.constant 0 : index
    %12 = vector.load %arg4[%c0_9, %c0_10] : memref<1x16xf32, #tpu.memory_space<vmem>>, vector<1x16xf32>
    %13 = vector.broadcast %12 : vector<1x16xf32> to vector<8x16xf32>
    %14 = arith.addf %11, %13 : vector<8x16xf32>
    %c0_11 = arith.constant 0 : index
    %c0_12 = arith.constant 0 : index
    %15 = vector.load %arg5[%c0_11, %c0_12] : memref<8x16xf32, #tpu.memory_space<vmem>>, vector<8x16xf32>
    tpu.vector_store %arg5[%c0_11, %c0_12], %14 {strides = array<i32>} : memref<8x16xf32, #tpu.memory_space<vmem>>, vector<8x16xf32>,
    return
  }
}

</mosaic_0001>

<llo_original>
// kernel: tpu_custom_call.1
$region0: #{tpu_custom_call.1}
  #allocation0 [shape = 'u32[]', space=smem, size = 0x4, offset = 0x4, fixed_abs, tag = 'smem constant byte address 0x4 - core index']
  #allocation1 [shape = 'u32[144,128]{1,0:T(1,128)}', space=vmem, size = 0x12000, scoped, tag = 'internal scratch']
  %s0 = inlined_call_operand.vmem [shape: f32[8,32], index: 0, kind: input, shape index: {}]
  %s1 = inlined_call_operand.vmem [shape: bf16[32,64], index: 1, kind: input, shape index: {}]
  %s2 = inlined_call_operand.vmem [shape: f32[1,64], index: 2, kind: input, shape index: {}]
  %s3 = inlined_call_operand.vmem [shape: bf16[64,16], index: 3, kind: input, shape index: {}]
  %s4 = inlined_call_operand.vmem [shape: f32[1,16], index: 4, kind: input, shape index: {}]
  %s5 = inlined_call_operand.hbm [shape: f32[8,16], index: 5, kind: output, shape index: {}]
  %s6 = sld [smem:[#allocation0]]
  $region30: #{tpu_custom_call.1} parent=0
    _
  %s8 = ssub.s32 1, %s6
  %s9 = scalar_select 0, %s8, %s6
  $region1: #{tpu_custom_call.1} parent=0
    #allocation2 [shape = 'u8[4096]{0}', space=vmem, size = 0x1000, scoped, tag = 'output window, operand 0, single buffered']
    #allocation3 [shape = 's32[1]{0}', space=sflag, size = 0x4, scoped, tag = 'scoped memory for tpu_custom_call.1']
    %10 = vsyncpa [#allocation3], 0
    // Predicated region
    $region2: #{tpu_custom_call.1} parent=1 // pred_check
      _
    $region3: #{tpu_custom_call.1} parent=1 // pred_check_branch
      %12 = sbr.rel (0) target = $region5
    $region4: #{tpu_custom_call.1} parent=1 // pred_region
      _
    $region5: #{tpu_custom_call.1} parent=1 // pred_fallthru
      _
    // Predicated region
    $region6: #{tpu_custom_call.1} parent=1 // pred_check
      _
    $region7: #{tpu_custom_call.1} parent=1 // pred_check_branch
      %14 = sbr.rel (0) target = $region9
    $region8: #{tpu_custom_call.1} parent=1 // pred_region
      _
    $region9: #{tpu_custom_call.1} parent=1 // pred_fallthru
      _
    // Predicated region
    $region10: #{tpu_custom_call.1} parent=1 // pred_check
      _
    $region11: #{tpu_custom_call.1} parent=1 // pred_check_branch
      %16 = sbr.rel (0) target = $region13
    $region12: #{tpu_custom_call.1} parent=1 // pred_region
      _
    $region13: #{tpu_custom_call.1} parent=1 // pred_fallthru
      _
    // Predicated region
    $region14: #{tpu_custom_call.1} parent=1 // pred_check
      _
    $region15: #{tpu_custom_call.1} parent=1 // pred_check_branch
      %18 = sbr.rel (0) target = $region17
    $region16: #{tpu_custom_call.1} parent=1 // pred_region
      _
    $region17: #{tpu_custom_call.1} parent=1 // pred_fallthru
      _
    // Predicated region
    $region18: #{tpu_custom_call.1} parent=1 // pred_check
      _
    $region19: #{tpu_custom_call.1} parent=1 // pred_check_branch
      %20 = sbr.rel (0) target = $region21
    $region20: #{tpu_custom_call.1} parent=1 // pred_region
      _
    $region21: #{tpu_custom_call.1} parent=1 // pred_fallthru
      _
    %v22 = vld [vmem:[%s0] sm:$0xff]
    %v23 = vpack.c.bf16 %v22, %v22
    %v24 = vld [vmem:[%s1] sm:$0xf]
    %v25 = vld [vmem:[%s1 + $0x4] sm:$0xf]
    %v26 = vld [vmem:[%s1 + $0x8] sm:$0xf]
    %v27 = vld [vmem:[%s1 + $0xc] sm:$0xf]
    %v28 = vld [vmem:[%s2] sm:$0x1]
    %v30 = vlaneseq
    %v31 = vshrl.u32 %v30, 7
    %v32 = vsub.s32 0, %v31
    %v33 = vrot.slane %v28, %v32
    %v39 = vunpack.c.l.b16 %v24
    %v40 = vunpack.c.l.b16 %v25
    %v41 = vunpack.c.l.b16 %v26
    %v42 = vunpack.c.l.b16 %v27
    %v43 = vpack.c.b16 %v40, %v39
    %v44 = vpack.c.b16 %v42, %v41
    %vm47 = vcmask 261120
    %v49 = vsel %vm47, %v23, 0
    %51 = vmatprep.subr.bf16.mxu0 0
    %52 = vmatpush1.bf16.msra.mxu0 %v43
    %53 = vmatprep.subr.bf16.mxu0 0
    %54 = vmatpush1.bf16.msra.mxu0 %v44
    %55 = vmatprep.subr.bf16.mxu0 0
    %56 = vmatpush1.bf16.msra.mxu0 0
    %57 = vmatprep.subr.bf16.mxu0 0
    %58 = vmatpush1.bf16.msra.mxu0 0
    %59 = vmatprep.subr.bf16.mxu0 0
    %60 = vmatpush1.bf16.msra.mxu0 0
    %61 = vmatprep.subr.bf16.mxu0 0
    %62 = vmatpush1.bf16.msra.mxu0 0
    %63 = vmatprep.subr.bf16.mxu0 0
    %64 = vmatpush1.bf16.msra.mxu0 0
    %65 = vmatprep.subr.bf16.mxu0 0
    %66 = vmatpush1.bf16.msra.mxu0 0
    %67 = vmatprep.subr.bf16.mxu0 0
    %68 = vmatpush1.bf16.msra.mxu0 0
    %69 = vmatprep.subr.bf16.mxu0 0
    %70 = vmatpush1.bf16.msra.mxu0 0
    %71 = vmatprep.subr.bf16.mxu0 0
    %72 = vmatpush1.bf16.msra.mxu0 0
    %73 = vmatprep.subr.bf16.mxu0 0
    %74 = vmatpush1.bf16.msra.mxu0 0
    %75 = vmatprep.subr.bf16.mxu0 0
    %76 = vmatpush1.bf16.msra.mxu0 0
    %77 = vmatprep.subr.bf16.mxu0 0
    %78 = vmatpush1.bf16.msra.mxu0 0
    %79 = vmatprep.subr.bf16.mxu0 0
    %80 = vmatpush1.bf16.msra.mxu0 0
    %81 = vmatprep.subr.bf16.mxu0 0
    %82 = vmatpush1.bf16.msra.mxu0 0
    %83 = vmatprep.mubr.bf16.mxu0 0
    %84 = vmatmul.mubr.bf16.gmra.mrb[0].mxu0 %v49
    %v85 = vpop.f32.mrb[0].mxu0
    %v86 = vadd.f32 %v33, %v85
    %v87 = vpop.f32.mrb[0].mxu0
    %v88 = vpop.f32.mrb[0].mxu0
    %v89 = vpop.f32.mrb[0].mxu0
    %90 = vdwg.mxu0
    %v91 = vmax.f32 %v86, 0.0
    %v92 = vpack.c.bf16 %v91, %v91
    %v93 = vld [vmem:[%s3] sm:$0xf]
    %v94 = vld [vmem:[%s3 + $0x4] sm:$0xf]
    %v95 = vld [vmem:[%s3 + $0x8] sm:$0xf]
    %v96 = vld [vmem:[%s3 + $0xc] sm:$0xf]
    %v97 = vld [vmem:[%s3 + $0x10] sm:$0xf]
    %v98 = vld [vmem:[%s3 + $0x14] sm:$0xf]
    %v99 = vld [vmem:[%s3 + $0x18] sm:$0xf]
    %v100 = vld [vmem:[%s3 + $0x1c] sm:$0xf]
    %v101 = vld [vmem:[%s4] sm:$0x1]
    %v103 = vlaneseq
    %v104 = vshrl.u32 %v103, 7
    %v105 = vsub.s32 0, %v104
    %v106 = vrot.slane %v101, %v105
    %v116 = vunpack.c.l.b16 %v93
    %v117 = vunpack.c.l.b16 %v94
    %v118 = vunpack.c.l.b16 %v95
    %v119 = vunpack.c.l.b16 %v96
    %v120 = vunpack.c.l.b16 %v97
    %v121 = vunpack.c.l.b16 %v98
    %v122 = vunpack.c.l.b16 %v99
    %v123 = vunpack.c.l.b16 %v100
    %v124 = vpack.c.b16 %v117, %v116
    %v125 = vpack.c.b16 %v119, %v118
    %v126 = vpack.c.b16 %v121, %v120
    %v127 = vpack.c.b16 %v123, %v122
    %vm132 = vcmask 523264
    %v134 = vsel %vm132, %v92, 0
    %136 = vmatprep.subr.bf16.mxu0 0
    %137 = vmatpush1.bf16.msra.mxu0 %v124
    %138 = vmatprep.subr.bf16.mxu0 0
    %139 = vmatpush1.bf16.msra.mxu0 %v125
    %140 = vmatprep.subr.bf16.mxu0 0
    %141 = vmatpush1.bf16.msra.mxu0 %v126
    %142 = vmatprep.subr.bf16.mxu0 0
    %143 = vmatpush1.bf16.msra.mxu0 %v127
    %144 = vmatprep.subr.bf16.mxu0 0
    %145 = vmatpush1.bf16.msra.mxu0 0
    %146 = vmatprep.subr.bf16.mxu0 0
    %147 = vmatpush1.bf16.msra.mxu0 0
    %148 = vmatprep.subr.bf16.mxu0 0
    %149 = vmatpush1.bf16.msra.mxu0 0
    %150 = vmatprep.subr.bf16.mxu0 0
    %151 = vmatpush1.bf16.msra.mxu0 0
    %152 = vmatprep.subr.bf16.mxu0 0
    %153 = vmatpush1.bf16.msra.mxu0 0
    %154 = vmatprep.subr.bf16.mxu0 0
    %155 = vmatpush1.bf16.msra.mxu0 0
    %156 = vmatprep.subr.bf16.mxu0 0
    %157 = vmatpush1.bf16.msra.mxu0 0
    %158 = vmatprep.subr.bf16.mxu0 0
    %159 = vmatpush1.bf16.msra.mxu0 0
    %160 = vmatprep.subr.bf16.mxu0 0
    %161 = vmatpush1.bf16.msra.mxu0 0
    %162 = vmatprep.subr.bf16.mxu0 0
    %163 = vmatpush1.bf16.msra.mxu0 0
    %164 = vmatprep.subr.bf16.mxu0 0
    %165 = vmatpush1.bf16.msra.mxu0 0
    %166 = vmatprep.subr.bf16.mxu0 0
    %167 = vmatpush1.bf16.msra.mxu0 0
    %168 = vmatprep.mubr.bf16.mxu0 0
    %169 = vmatmul.mubr.bf16.gmra.mrb[0].mxu0 %v134
    %v170 = vpop.f32.mrb[0].mxu0
    %v171 = vadd.f32 %v106, %v170
    %v172 = vpop.f32.mrb[0].mxu0
    %v173 = vpop.f32.mrb[0].mxu0
    %v174 = vpop.f32.mrb[0].mxu0
    %175 = vdwg.mxu0
    %vm176 = vcmask 130048
    %177 = vst.msk [vmem:[#allocation2] sm:$0xff] %vm176, %v171
    // Predicated region
    $region22: #{tpu_custom_call.1} parent=1 // pred_check
      _
    $region23: #{tpu_custom_call.1} parent=1 // pred_check_branch
      %179 = sbr.rel (0) target = $region25
    $region24: #{tpu_custom_call.1} parent=1 // pred_region
      %s181 = ssub.s32 128, 128
      %182 = vsyncadd [#allocation3], %s181
      %s184 = sshll.u32 [#allocation2], 4
      %s185 = int_to_ptr.vmem [resolvable:$true] %s184
      %187 = dma.vmem_to_hbm [thread:$0]  %s185, 128, %s5, [#allocation3]
    $region25: #{tpu_custom_call.1} parent=1 // pred_fallthru
      _
    // Predicated region
    $region26: #{tpu_custom_call.1} parent=1 // pred_check
      _
    $region27: #{tpu_custom_call.1} parent=1 // pred_check_branch
      %189 = sbr.rel (0) target = $region29
    $region28: #{tpu_custom_call.1} parent=1 // pred_region
      %190 = dma.done [#allocation3], 128
    $region29: #{tpu_custom_call.1} parent=1 // pred_fallthru
      _
    %191 = vsyncpa [#allocation3], 1

</llo_original>
